<compile_context>
chip_gen: v5e
topology: v5e:2x2
jax: 0.10.0
libtpu: 0.0.40
codegen_flags: <defaults>
</compile_context>

<pallas_src>
import jax
import jax.numpy as jnp
from jax.experimental import pallas as pl
from jax.experimental.pallas import tpu as pltpu


def _descriptor_kernel(x_ref, xflat_ref, cidx_ref, o_ref):
    # x_ref:     (TN, A, C)    per-atom coordinates (minuend source)
    # xflat_ref: (TN, 1, A*C)  flattened coordinates (subtrahend, sublane-broadcast)
    # cidx_ref:  (1, 1, A*C)   int32 lane pattern [0..C-1, 0..C-1, ...] (tiny)
    # o_ref:     (TN, A, A*C)  lane-dense output block
    _, _, c = x_ref.shape
    x = x_ref[...]
    lane_c = cidx_ref[...]                      # stays (1, 1, A*C): compares are tiny

    # minuend[n, i, a*C + k] = x[n, i, k]
    # Built only from size-1-dim broadcasts + selects; masks and values broadcast
    # inside jnp.where, so no full-block int32 temps or full-block compares.
    minu = x[:, :, c - 1:c]                     # (TN, A, 1)
    for k in range(c - 2, -1, -1):
        minu = jnp.where(lane_c == k, x[:, :, k:k + 1], minu)

    # out[n, i, a*C + k] = x[n, i, k] - x[n, a, k]
    o_ref[...] = minu - xflat_ref[...]


def _cdiv(a, b):
    return -(-a // b)


def _round_up(v, m):
    return _cdiv(v, m) * m


def _vmem_budget_and_limit():
    """Per-step (double-buffered) block budget + explicit scoped-VMEM limit."""
    try:
        cap = int(pltpu.get_tpu_info().vmem_capacity_bytes)
    except Exception:  # pragma: no cover - conservative fallback (v7x per-TC size)
        cap = 64 * 1024 * 1024
    if cap >= 96 * 1024 * 1024:        # v5e / v6e: 128 MiB physical VMEM
        budget = 24 * 1024 * 1024
    else:                              # v7x: 64 MiB per TensorCore
        budget = 20 * 1024 * 1024
    return budget, budget + 8 * 1024 * 1024


def _pick_block_rows(N, A, C, itemsize, budget):
    """Largest TN whose PADDED, double-buffered blocks fit the budget, then capped so
    the grid keeps >= ~4 (preferably even) steps for v7x's two TensorCores."""
    AC = A * C
    granule = 8 * max(1, 4 // itemsize)          # sublane granule: 8 f32 / 16 bf16 / 32 i8
    sub_a = _round_up(A, granule)
    lanes_c = _round_up(C, 128)                  # x's lane dim (3) pads to a full 128 tile
    lanes_ac = _round_up(AC, 128)
    per_row = 2 * itemsize * (                   # 2 = double buffering
        sub_a * lanes_c                          # x      (TN, A, C)
        + granule * lanes_ac                     # xflat  (TN, 1, 3A)
        + sub_a * lanes_ac                       # output (TN, A, 3A)
    )
    resident = 2 * 4 * 8 * lanes_ac              # cidx tile (int32, double-buffered)
    tn = max(1, max(1, budget - resident) // per_row)
    tn = min(tn, N)
    tn = min(tn, max(1, _cdiv(N, 4)))            # keep >= ~4 grid steps (v7x: 2 TCs)

    steps = _cdiv(N, tn)                         # prefer an even grid length
    if steps > 1 and steps % 2 == 1:
        tn_alt = max(1, _cdiv(N, steps + 1))
        if _cdiv(N, tn_alt) % 2 == 0:
            tn = tn_alt
    return int(tn)


def descriptor_forward(x, *, use_pallas=None, block_rows=None):
    """x: (N, A, 3) -> (N, A, 3*A); identical semantics to Descriptor.forward."""
    N, A, C = x.shape
    itemsize = jnp.dtype(x.dtype).itemsize
    out_bytes = N * A * A * C * itemsize

    if use_pallas is None:
        # Below ~256 KiB of output a fused XLA broadcast-subtract beats the
        # pallas_call fixed launch + per-step overhead.
        use_pallas = out_bytes >= (256 * 1024)

    if not use_pallas:
        d = x[:, :, None, :] - x[:, None, :, :]
        return d.reshape(N, A, A * C)

    budget, vmem_limit = _vmem_budget_and_limit()
    if block_rows is None:
        tn = _pick_block_rows(N, A, C, itemsize, budget)
    else:
        tn = int(min(block_rows, N))

    xflat = x.reshape(N, 1, A * C)                                     # tiny input-side glue
    cidx = jnp.tile(jnp.arange(C, dtype=jnp.int32), A).reshape(1, 1, A * C)

    grid = (_cdiv(N, tn),)
    return pl.pallas_call(
        _descriptor_kernel,
        out_shape=jax.ShapeDtypeStruct((N, A, A * C), x.dtype),
        grid=grid,
        in_specs=[
            pl.BlockSpec((tn, A, C), lambda n: (n, 0, 0)),
            pl.BlockSpec((tn, 1, A * C), lambda n: (n, 0, 0)),
            pl.BlockSpec((1, 1, A * C), lambda n: (0, 0, 0)),
        ],
        out_specs=pl.BlockSpec((tn, A, A * C), lambda n: (n, 0, 0)),
        compiler_params=pltpu.CompilerParams(
            dimension_semantics=("parallel",),
            vmem_limit_bytes=int(vmem_limit),
        ),
    )(x, xflat, cidx)


def _reference(x):
    # Pure-JAX mirror of the PyTorch loop + cat.
    N, A, C = x.shape
    return jnp.concatenate([x - x[:, a, None] for a in range(A)], axis=2)


if __name__ == "__main__":
    key = jax.random.PRNGKey(0)

    # Case 1: canonical tiny shape (N x A x 3), Pallas path forced, auto block sizing.
    x1 = jax.random.normal(key, (2, 4, 3), dtype=jnp.float32)
    out1 = jax.block_until_ready(descriptor_forward(x1, use_pallas=True))
    assert out1.shape == (2, 4, 12), out1.shape
    assert jnp.allclose(out1, _reference(x1), atol=1e-6), "mismatch vs reference (case 1)"

    # Case 2: multi-block grid with a partial trailing block (N=20, TN=8 -> grid=3).
    x2 = jax.random.normal(jax.random.PRNGKey(0), (20, 8, 3), dtype=jnp.float32)
    out2 = jax.block_until_ready(descriptor_forward(x2, use_pallas=True, block_rows=8))
    assert out2.shape == (20, 8, 24), out2.shape
    assert jnp.allclose(out2, _reference(x2), atol=1e-6), "mismatch vs reference (case 2)"

    # Case 3: auto block sizing on a multi-step grid (N=32 -> TN=8, 4 even steps).
    x3 = jax.random.normal(jax.random.PRNGKey(0), (32, 16, 3), dtype=jnp.float32)
    out3 = jax.block_until_ready(descriptor_forward(x3, use_pallas=True))
    assert out3.shape == (32, 16, 48), out3.shape
    assert jnp.allclose(out3, _reference(x3), atol=1e-6), "mismatch vs reference (case 3)"

    # Case 4: auto-dispatch (tiny output -> fused XLA path) stays consistent.
    out4 = jax.block_until_ready(descriptor_forward(x1))
    assert jnp.allclose(out4, _reference(x1), atol=1e-6), "mismatch vs reference (case 4)"

    print("KERNEL_OK")
</pallas_src>

<mosaic_0001>
module attributes {stable_mosaic.version = 11 : i64} {
  func.func @_descriptor_kernel(%arg0: i32, %arg1: memref<1x4x3xf32, #tpu.memory_space<vmem>>, %arg2: memref<1x1x12xf32, #tpu.memory_space<vmem>>, %arg3: memref<1x1x12xi32, #tpu.memory_space<vmem>>, %arg4: memref<1x4x12xf32, #tpu.memory_space<vmem>>) attributes {dimension_semantics = [#tpu.dimension_semantics<parallel>], iteration_bounds = array<i64: 2>, scalar_prefetch = 0 : i64, scratch_operands = 0 : i64, tpu.core_type = #tpu.core_type<tc>, window_params = [{transform_indices = @transform_0, window_bounds = array<i64: 1, 4, 3>}, {transform_indices = @transform_1, window_bounds = array<i64: 1, 1, 12>}, {pipeline_mode = #tpu.pipeline_mode<synchronous>, transform_indices = @transform_2, window_bounds = array<i64: 1, 1, 12>}, {transform_indices = @transform_3, window_bounds = array<i64: 1, 4, 12>}]} {
    %c0 = arith.constant 0 : index
    %c0_0 = arith.constant 0 : index
    %c0_1 = arith.constant 0 : index
    %0 = vector.load %arg1[%c0, %c0_0, %c0_1] : memref<1x4x3xf32, #tpu.memory_space<vmem>>, vector<1x4x3xf32>
    %c0_2 = arith.constant 0 : index
    %c0_3 = arith.constant 0 : index
    %c0_4 = arith.constant 0 : index
    %1 = vector.load %arg3[%c0_2, %c0_3, %c0_4] : memref<1x1x12xi32, #tpu.memory_space<vmem>>, vector<1x1x12xi32>
    %2 = vector.extract_strided_slice %0 {offsets = [0, 0, 2], sizes = [1, 4, 1], strides = [1, 1, 1]} : vector<1x4x3xf32> to vector<1x4x1xf32>
    %c1_i32 = arith.constant 1 : i32
    %3 = vector.broadcast %c1_i32 : i32 to vector<1x1x12xi32>
    %4 = arith.cmpi eq, %1, %3 : vector<1x1x12xi32>
    %5 = vector.extract_strided_slice %0 {offsets = [0, 0, 1], sizes = [1, 4, 1], strides = [1, 1, 1]} : vector<1x4x3xf32> to vector<1x4x1xf32>
    %6 = vector.shape_cast %4 : vector<1x1x12xi1> to vector<1x1x12xi1>
    %7 = vector.broadcast %6 : vector<1x1x12xi1> to vector<1x4x12xi1>
    %8 = vector.shape_cast %5 : vector<1x4x1xf32> to vector<1x4x1xf32>
    %9 = vector.broadcast %8 : vector<1x4x1xf32> to vector<1x4x12xf32>
    %10 = vector.shape_cast %2 : vector<1x4x1xf32> to vector<1x4x1xf32>
    %11 = vector.broadcast %10 : vector<1x4x1xf32> to vector<1x4x12xf32>
    %12 = arith.select %7, %9, %11 : vector<1x4x12xi1>, vector<1x4x12xf32>
    %c0_i32 = arith.constant 0 : i32
    %13 = vector.broadcast %c0_i32 : i32 to vector<1x1x12xi32>
    %14 = arith.cmpi eq, %1, %13 : vector<1x1x12xi32>
    %15 = vector.extract_strided_slice %0 {offsets = [0, 0, 0], sizes = [1, 4, 1], strides = [1, 1, 1]} : vector<1x4x3xf32> to vector<1x4x1xf32>
    %16 = vector.shape_cast %14 : vector<1x1x12xi1> to vector<1x1x12xi1>
    %17 = vector.broadcast %16 : vector<1x1x12xi1> to vector<1x4x12xi1>
    %18 = vector.shape_cast %15 : vector<1x4x1xf32> to vector<1x4x1xf32>
    %19 = vector.broadcast %18 : vector<1x4x1xf32> to vector<1x4x12xf32>
    %20 = arith.select %17, %19, %12 : vector<1x4x12xi1>, vector<1x4x12xf32>
    %c0_5 = arith.constant 0 : index
    %c0_6 = arith.constant 0 : index
    %c0_7 = arith.constant 0 : index
    %21 = vector.load %arg2[%c0_5, %c0_6, %c0_7] : memref<1x1x12xf32, #tpu.memory_space<vmem>>, vector<1x1x12xf32>
    %22 = vector.broadcast %21 : vector<1x1x12xf32> to vector<1x4x12xf32>
    %23 = arith.subf %20, %22 : vector<1x4x12xf32>
    %c0_8 = arith.constant 0 : index
    %c0_9 = arith.constant 0 : index
    %c0_10 = arith.constant 0 : index
    %24 = vector.load %arg4[%c0_8, %c0_9, %c0_10] : memref<1x4x12xf32, #tpu.memory_space<vmem>>, vector<1x4x12xf32>
    tpu.vector_store %arg4[%c0_8, %c0_9, %c0_10], %23 {strides = array<i32>} : memref<1x4x12xf32, #tpu.memory_space<vmem>>, vector<1x4x12xf32>,
    return
  }
  func.func @transform_0(%arg0: i32) -> (i32, i32, i32) {
    %c0_i32 = arith.constant 0 : i32
    %c0_i32_0 = arith.constant 0 : i32
    %c0_i32_1 = arith.constant 0 : i32
    return %arg0, %c0_i32, %c0_i32_0 : i32, i32, i32
  }
  func.func @transform_1(%arg0: i32) -> (i32, i32, i32) {
    %c0_i32 = arith.constant 0 : i32
    %c0_i32_0 = arith.constant 0 : i32
    %c0_i32_1 = arith.constant 0 : i32
    return %arg0, %c0_i32, %c0_i32_0 : i32, i32, i32
  }
  func.func @transform_2(%arg0: i32) -> (i32, i32, i32) {
    %c0_i32 = arith.constant 0 : i32
    %c0_i32_0 = arith.constant 0 : i32
    %c0_i32_1 = arith.constant 0 : i32
    %c0_i32_2 = arith.constant 0 : i32
    return %c0_i32, %c0_i32_0, %c0_i32_1 : i32, i32, i32
  }
  func.func @transform_3(%arg0: i32) -> (i32, i32, i32) {
    %c0_i32 = arith.constant 0 : i32
    %c0_i32_0 = arith.constant 0 : i32
    %c0_i32_1 = arith.constant 0 : i32
    return %arg0, %c0_i32, %c0_i32_0 : i32, i32, i32
  }
}

</mosaic_0001>

<llo_original>
// kernel: tpu_custom_call.1
$region0: #{tpu_custom_call.1}
  #allocation0 [shape = 'u32[]', space=smem, size = 0x4, offset = 0x4, fixed_abs, tag = 'smem constant byte address 0x4 - core index']
  #allocation1 [shape = 'u32[72,128]{1,0:T(1,128)}', space=vmem, size = 0x9000, scoped, tag = 'internal scratch']
  %s0 = inlined_call_operand.vmem [shape: f32[2,4,3], index: 0, kind: input, shape index: {}]
  %s1 = inlined_call_operand.vmem [shape: f32[2,1,12], index: 1, kind: input, shape index: {}]
  %s2 = inlined_call_operand.vmem [shape: s32[1,1,12], index: 2, kind: input, shape index: {}]
  %s3 = inlined_call_operand.hbm [shape: f32[2,4,12], index: 3, kind: output, shape index: {}]
  %s4 = sld [smem:[#allocation0]]
  $region45: #{tpu_custom_call.1} parent=0
    _
  %s6 = ssub.s32 1, %s4
  %s7 = scalar_select 0, %s6, %s4
  $region1: #{tpu_custom_call.1} parent=0
    #allocation2 [shape = 'u8[4096]{0}', space=vmem, size = 0x1000, scoped, tag = 'output window, operand 0']
    #allocation3 [shape = 's32[2]{0}', space=sflag, size = 0x8, scoped, tag = 'scoped memory for tpu_custom_call.1']
    %8 = vsyncpa [#allocation3], 0
    %s9 = scalar_lea.sflag [#allocation3], 1
    %10 = vsyncpa %s9, 0
    loop: start=0, step=1, limit=4
    $region2: #{tpu_custom_call.1} parent=1 // loop_pre_header
      _
    $region3: #{tpu_custom_call.1} parent=1 // loop_header
      %s12 = sphi 0, %s16
      %p13 = scmp.ge.s32.totalorder %s12, 4
      %s22 = sphi 0, %s24
      %s25 = sphi 0, %s22
      %s26 = sphi 0, %s25
      %s42 = sphi 0, %s26
      %s48 = sphi 0, %s50
      %s51 = sphi 0, %s48
      %s52 = sphi 0, %s51
      %s68 = sphi 0, %s52
      %s72 = sphi 0, %s72
      %s74 = sphi 0, %s72
      %s75 = sphi 0, %s74
      %s89 = sphi 0, %s75
      %s95 = sphi 0, %s97
      %s98 = sphi 0, %s95
      %s99 = sphi 0, %s98
      %s115 = sphi 0, %s99
    $region4: #{tpu_custom_call.1} parent=1 // loop_header_branch
      %15 = sbr.rel (%p13) target = $region8
    $region5: #{tpu_custom_call.1} parent=1 // loop_body
      %s17 = ssub.s32 %s12, 1
      %s18 = ssub.s32 %s12, 2
      %s19 = sadd.s32 %s12, 1
      %s20 = ssub.s32 %s12, %s19
      %p21 = scmp.eq.s32.totalorder %s20, 0
      %s23 = sadd.s32 %s22, 1
      %s24 = scalar_select %p21, %s22, %s23
      %p27 = pneg %p21
      %p28 = scmp.eq.s32.totalorder %s12, 1
      %p29 = por %p27, %p28
      %p30 = scmp.ne.s32.totalorder %s22, %s25
      %p31 = scmp.eq.s32.totalorder %s12, 0
      %p32 = por %p30, %p31
      %p33 = scmp.ne.s32.totalorder %s22, %s25
      %p34 = scmp.eq.s32.totalorder %s17, 1
      %p35 = por %p33, %p34
      %p36 = scmp.ne.s32.totalorder %s25, %s26
      %p37 = scmp.eq.s32.totalorder %s17, 0
      %p38 = por %p36, %p37
      %p39 = scmp.ne.s32.totalorder %s25, %s26
      %p40 = scmp.eq.s32.totalorder %s18, 1
      %p41 = por %p39, %p40
      %p43 = scmp.ne.s32.totalorder %s26, %s42
      %p44 = scmp.eq.s32.totalorder %s18, 0
      %p45 = por %p43, %p44
      %s46 = ssub.s32 %s12, %s19
      %p47 = scmp.eq.s32.totalorder %s46, 0
      %s49 = sadd.s32 %s48, 1
      %s50 = scalar_select %p47, %s48, %s49
      %p53 = pneg %p47
      %p54 = scmp.eq.s32.totalorder %s12, 1
      %p55 = por %p53, %p54
      %p56 = scmp.ne.s32.totalorder %s48, %s51
      %p57 = scmp.eq.s32.totalorder %s12, 0
      %p58 = por %p56, %p57
      %p59 = scmp.ne.s32.totalorder %s48, %s51
      %p60 = scmp.eq.s32.totalorder %s17, 1
      %p61 = por %p59, %p60
      %p62 = scmp.ne.s32.totalorder %s51, %s52
      %p63 = scmp.eq.s32.totalorder %s17, 0
      %p64 = por %p62, %p63
      %p65 = scmp.ne.s32.totalorder %s51, %s52
      %p66 = scmp.eq.s32.totalorder %s18, 1
      %p67 = por %p65, %p66
      %p69 = scmp.ne.s32.totalorder %s52, %s68
      %p70 = scmp.eq.s32.totalorder %s18, 0
      %p71 = por %p69, %p70
      %s73 = sadd.s32 %s72, 1
      %p76 = scmp.eq.s32.totalorder %s12, 1
      %p77 = scmp.ne.s32.totalorder %s72, %s74
      %p78 = scmp.eq.s32.totalorder %s12, 0
      %p79 = por %p77, %p78
      %p80 = scmp.ne.s32.totalorder %s72, %s74
      %p81 = scmp.eq.s32.totalorder %s17, 1
      %p82 = por %p80, %p81
      %p83 = scmp.ne.s32.totalorder %s74, %s75
      %p84 = scmp.eq.s32.totalorder %s17, 0
      %p85 = por %p83, %p84
      %p86 = scmp.ne.s32.totalorder %s74, %s75
      %p87 = scmp.eq.s32.totalorder %s18, 1
      %p88 = por %p86, %p87
      %p90 = scmp.ne.s32.totalorder %s75, %s89
      %p91 = scmp.eq.s32.totalorder %s18, 0
      %p92 = por %p90, %p91
      %s93 = ssub.s32 %s12, %s19
      %p94 = scmp.eq.s32.totalorder %s93, 0
      %s96 = sadd.s32 %s95, 1
      %s97 = scalar_select %p94, %s95, %s96
      %p100 = pneg %p94
      %p101 = scmp.eq.s32.totalorder %s12, 1
      %p102 = por %p100, %p101
      %p103 = scmp.ne.s32.totalorder %s95, %s98
      %p104 = scmp.eq.s32.totalorder %s12, 0
      %p105 = por %p103, %p104
      %p106 = scmp.ne.s32.totalorder %s95, %s98
      %p107 = scmp.eq.s32.totalorder %s17, 1
      %p108 = por %p106, %p107
      %p109 = scmp.ne.s32.totalorder %s98, %s99
      %p110 = scmp.eq.s32.totalorder %s17, 0
      %p111 = por %p109, %p110
      %p112 = scmp.ne.s32.totalorder %s98, %s99
      %p113 = scmp.eq.s32.totalorder %s18, 1
      %p114 = por %p112, %p113
      %p116 = scmp.ne.s32.totalorder %s99, %s115
      %p117 = scmp.eq.s32.totalorder %s18, 0
      %p118 = por %p116, %p117
      %p119 = scmp.le.s32.totalorder 1, %s12
      %p120 = scmp.lt.s32.totalorder %s12, 3
      %p121 = pnand %p119, %p120
      %p122 = pneg %p121
      // Predicated region
      $region9: #{tpu_custom_call.1} parent=5 // pred_check
        _
      $region10: #{tpu_custom_call.1} parent=5 // pred_check_branch
        %124 = sbr.rel (%p121) target = $region12
      $region11: #{tpu_custom_call.1} parent=5 // pred_region
        %s125 = ssub.s32 %s12, 1
        // Predicated region
        $region13: #{tpu_custom_call.1} parent=11 // pred_check
          %p126 = pneg %p85
        $region14: #{tpu_custom_call.1} parent=11 // pred_check_branch
          %128 = sbr.rel (%p126) target = $region16
        $region15: #{tpu_custom_call.1} parent=11 // pred_region
          _
        $region16: #{tpu_custom_call.1} parent=11 // pred_fallthru
          _
      $region12: #{tpu_custom_call.1} parent=5 // pred_fallthru
        _
      %p129 = scmp.lt.s32.totalorder %s12, 2
      // Predicated region
      $region17: #{tpu_custom_call.1} parent=5 // pred_check
        %p130 = pneg %p129
      $region18: #{tpu_custom_call.1} parent=5 // pred_check_branch
        %132 = sbr.rel (%p130) target = $region20
      $region19: #{tpu_custom_call.1} parent=5 // pred_region
        // Predicated region
        $region21: #{tpu_custom_call.1} parent=19 // pred_check
          %p133 = pneg %p32
        $region22: #{tpu_custom_call.1} parent=19 // pred_check_branch
          %135 = sbr.rel (%p133) target = $region24
        $region23: #{tpu_custom_call.1} parent=19 // pred_region
          %p136 = scmp.lt.s32.totalorder %s12, 1
          %s137 = scalar_select %p136, %s12, 1
          %s138 = smul.addr %s137, 4
          %s139 = scalar_lea.vmem %s0, %s138
        $region24: #{tpu_custom_call.1} parent=19 // pred_fallthru
          _
        // Predicated region
        $region25: #{tpu_custom_call.1} parent=19 // pred_check
          %p140 = pneg %p58
        $region26: #{tpu_custom_call.1} parent=19 // pred_check_branch
          %142 = sbr.rel (%p140) target = $region28
        $region27: #{tpu_custom_call.1} parent=19 // pred_region
          %p143 = scmp.lt.s32.totalorder %s12, 1
          %s144 = scalar_select %p143, %s12, 1
          %s145 = scalar_lea.vmem %s1, %s144
        $region28: #{tpu_custom_call.1} parent=19 // pred_fallthru
          _
      $region20: #{tpu_custom_call.1} parent=5 // pred_fallthru
        _
      %p146 = scmp.le.s32.totalorder 1, %s12
      %p147 = scmp.lt.s32.totalorder %s12, 3
      %p148 = pnand %p146, %p147
      %p149 = pneg %p148
      // Predicated region
      $region29: #{tpu_custom_call.1} parent=5 // pred_check
        _
      $region30: #{tpu_custom_call.1} parent=5 // pred_check_branch
        %151 = sbr.rel (%p148) target = $region32
      $region31: #{tpu_custom_call.1} parent=5 // pred_region
        %s152 = ssub.s32 %s12, 1
        %p153 = scmp.lt.s32.totalorder %s17, 1
        %s154 = scalar_select %p153, %s17, 1
        %s155 = smul.addr %s154, 4
        %s156 = scalar_lea.vmem %s0, %s155
        %p157 = pneg %p38
        %p158 = pneg %p35
        %p159 = scmp.lt.s32.totalorder %s17, 1
        %s160 = scalar_select %p159, %s17, 1
        %s161 = scalar_lea.vmem %s1, %s160
        %p162 = pneg %p64
        %p163 = pneg %p61
        %p164 = pneg %p85
        %p165 = pneg %p82
        %p166 = pneg %p111
        %p167 = pneg %p108
        %s168 = sand.u32 %s98, 1
        %s169 = scalar_lea.sflag [#allocation3], %s168
        %s170 = sand.u32 %s98, 1
        %s171 = smul.addr %s170, 4
        %s172 = scalar_lea.vmem [#allocation2], %s171
        %p173 = scmp.lt.s32.totalorder %s17, 1
        %s174 = scalar_select %p173, %s17, 1
        %s175 = smul.addr %s174, 4
        %s176 = scalar_lea.vmem %s0, %s175
        %p177 = scmp.lt.s32.totalorder %s17, 1
        %s178 = scalar_select %p177, %s17, 1
        %s179 = scalar_lea.vmem %s1, %s178
        %v180 = vld [vmem:[%s176] sm:$0xf]
        %v181 = vld [vmem:[%s2] sm:$0x1]
        %vm182 = vcmp.eq.s32.totalorder %v181, 1
        %v183 = vsel %vm182, 1, 0
        %v184 = vperm.slane %v183, 0
        %vm185 = vcmp.eq.s32.totalorder %v184, 1
        %187 = vset.pattern.permute.xlu0 1
        %188 = vperm.xlu0 %187, %v180
        %v189 = vpop.permute.xlu0 %188
        %191 = vset.pattern.permute.xlu0 2
        %192 = vperm.xlu0 %191, %v180
        %v193 = vpop.permute.xlu0 %192
        %v195 = vsel %vm185, %v189, %v193
        %vm196 = vcmp.eq.s32.totalorder %v181, 0
        %v197 = vsel %vm196, 1, 0
        %v198 = vperm.slane %v197, 0
        %vm199 = vcmp.eq.s32.totalorder %v198, 1
        %200 = vset.pattern.permute.xlu0 0
        %201 = vperm.xlu0 %200, %v180
        %v202 = vpop.permute.xlu0 %201
        %v204 = vsel %vm199, %v202, %v195
        %v205 = vld [vmem:[%s179] sm:$0x1]
        %v207 = vperm.slane %v205, 0
        %v209 = vsub.f32 %v204, %v207
        %vm210 = vcmask 93184
        %211 = vst.msk [vmem:[%s172] sm:$0xf] %vm210, %v209
        %s212 = sand.u32 %s98, 1
        %s213 = scalar_lea.sflag [#allocation3], %s212
        %s214 = sand.u32 %s98, 1
        %s215 = smul.addr %s214, 4
        %s216 = scalar_lea.vmem [#allocation2], %s215
        // Predicated region
        $region33: #{tpu_custom_call.1} parent=31 // pred_check
          %p217 = pneg %p108
        $region34: #{tpu_custom_call.1} parent=31 // pred_check_branch
          %219 = sbr.rel (%p217) target = $region36
        $region35: #{tpu_custom_call.1} parent=31 // pred_region
          %221 = vsyncadd %s213, 0
          %s222 = smul.addr %s17, 4
          %s223 = scalar_lea.hbm %s3, %s222
          %s225 = sshll.u32 %s216, 4
          %s226 = int_to_ptr.vmem [resolvable:$true] %s225
          %s227 = sshll.u32 %s223, 4
          %s228 = int_to_ptr.hbm [resolvable:$true] %s227
          %230 = dma.vmem_to_hbm [thread:$0]  %s226, 64, %s228, %s213
        $region36: #{tpu_custom_call.1} parent=31 // pred_fallthru
          _
      $region32: #{tpu_custom_call.1} parent=5 // pred_fallthru
        _
      %p231 = scmp.le.s32.totalorder 2, %s12
      // Predicated region
      $region37: #{tpu_custom_call.1} parent=5 // pred_check
        %p232 = pneg %p231
      $region38: #{tpu_custom_call.1} parent=5 // pred_check_branch
        %234 = sbr.rel (%p232) target = $region40
      $region39: #{tpu_custom_call.1} parent=5 // pred_region
        %s235 = ssub.s32 %s12, 2
        // Predicated region
        $region41: #{tpu_custom_call.1} parent=39 // pred_check
          %p236 = pneg %p114
        $region42: #{tpu_custom_call.1} parent=39 // pred_check_branch
          %238 = sbr.rel (%p236) target = $region44
        $region43: #{tpu_custom_call.1} parent=39 // pred_region
          %s239 = sand.u32 %s99, 1
          %s240 = scalar_lea.sflag [#allocation3], %s239
          %s241 = sand.u32 %s99, 1
          %s242 = smul.addr %s241, 4
          %s243 = scalar_lea.vmem [#allocation2], %s242
          %245 = dma.done %s240, 64
        $region44: #{tpu_custom_call.1} parent=39 // pred_fallthru
          _
      $region40: #{tpu_custom_call.1} parent=5 // pred_fallthru
        _
    $region6: #{tpu_custom_call.1} parent=1 // loop_footer
      %s16 = sadd.s32 1, %s12
    $region7: #{tpu_custom_call.1} parent=1 // loop_footer_branch
      %11 = sbr.rel target = $region3
    $region8: #{tpu_custom_call.1} parent=1 // loop_exit
      _
    %246 = vsyncpa [#allocation3], 1
    %s247 = scalar_lea.sflag [#allocation3], 1
    %248 = vsyncpa %s247, 1

</llo_original>
